<compile_context>
chip_gen: v6e
topology: v6e:2x2x1
jax: 0.10.0
libtpu: 0.0.40
codegen_flags: <defaults>
</compile_context>

<pallas_src>
import functools

import jax
import jax.numpy as jnp
from jax.experimental import pallas as pl
from jax.experimental.pallas import tpu as pltpu

NUM_HIST = 5       # len(MODEL_WORKLOAD_HIST_INPUTS)
NUM_NORMAL = 10    # len(MODEL_WORKLOAD_NORMAL_INPUTS)
NEG_SLOPE = 0.01   # F.leaky_relu default
NONHIST_PAD = 16   # nonhist zero-padded to 16 lanes
OUT_PAD = 128      # lane-dense output padding (sliced back to num_outputs outside)


def _leaky(x):
    return jnp.where(x >= 0, x, NEG_SLOPE * x)


# ---------------------------------------------------------------------------
# Kernel (one grid step = one block of `bb` batch samples, all S sets each)
# ---------------------------------------------------------------------------
def workload_kernel(x_ref, mn_ref, e_ref, nh_ref,
                    w1_ref, b1_ref, w2_ref, b2_ref,
                    wo1h_ref, wo1n_ref, bo1_ref,
                    wo2_ref, bo2_ref, out_ref):
    rows, _ = x_ref.shape            # rows = bb * S
    bb = out_ref.shape[0]            # batch samples in this block
    S = rows // bb

    # --- fused per-branch hist MLPs: two block-diagonal bf16 MXU matmuls (f32 acc) ----
    h = jnp.dot(x_ref[...], w1_ref[...], preferred_element_type=jnp.float32)
    h = _leaky(h + b1_ref[...])
    h = jnp.dot(h.astype(w2_ref.dtype), w2_ref[...], preferred_element_type=jnp.float32)
    h = _leaky(h + b2_ref[...])                                    # [rows, G*H] f32

    # --- masked mean over S ------------------------------------------------------------
    # expand compact normalized mask [rows, G] -> [rows, G*H] via a tiny MXU matmul
    mexp = jnp.dot(mn_ref[...], e_ref[...], preferred_element_type=jnp.float32)
    w = h * mexp                                                   # VPU, f32 (1/sum(mask) pre-folded)
    # block-local per-sample sum over S rows: selector matmul [bb, rows] @ [rows, G*H]
    r = jax.lax.broadcasted_iota(jnp.int32, (bb, rows), 1)
    q = jax.lax.broadcasted_iota(jnp.int32, (bb, rows), 0)
    sel = ((r >= q * S) & (r < (q + 1) * S)).astype(jnp.float32)
    feats = jnp.dot(sel, w, preferred_element_type=jnp.float32)    # [bb, G*H] f32

    # --- out_mlp1: two partial matmuls (concat-free) ------------------------------------
    c = jnp.dot(feats.astype(wo1h_ref.dtype), wo1h_ref[...],
                preferred_element_type=jnp.float32)
    c = c + jnp.dot(nh_ref[...], wo1n_ref[...], preferred_element_type=jnp.float32)
    c = _leaky(c + bo1_ref[...])                                   # [bb, H] f32

    # --- out_mlp2 (lane-dense, zero-padded columns) -------------------------------------
    out_ref[...] = (jnp.dot(c.astype(wo2_ref.dtype), wo2_ref[...],
                            preferred_element_type=jnp.float32)
                    + bo2_ref[...]).astype(out_ref.dtype)


# ---------------------------------------------------------------------------
# One-time weight packing (NOT in the per-call path)
# ---------------------------------------------------------------------------
def _block_diag(blocks):
    g = len(blocks)
    r, c = blocks[0].shape
    out = jnp.zeros((g * r, g * c), blocks[0].dtype)
    for i, blk in enumerate(blocks):
        out = out.at[i * r:(i + 1) * r, i * c:(i + 1) * c].set(blk)
    return out


def prepare_params(params, compute_dtype=jnp.bfloat16):
    """Pack / pad the module weights once; returns VMEM-friendly buffers."""
    w1, b1, w2, b2, wo1, bo1, wo2, bo2 = params
    G, L, H = w1.shape
    GH = G * H
    O = wo2.shape[-1]
    assert G == NUM_HIST
    assert NUM_NORMAL <= NONHIST_PAD, "nonhist padding too small"
    assert O <= OUT_PAD, "num_outputs exceeds the lane-dense output padding"
    assert wo1.shape[0] == GH + NUM_NORMAL

    cd = compute_dtype
    w1bd = _block_diag([w1[g] for g in range(G)]).astype(cd)       # [G*L, G*H]
    w2bd = _block_diag([w2[g] for g in range(G)]).astype(cd)       # [G*H, G*H]
    bh1 = b1.reshape(1, GH).astype(jnp.float32)
    bh2 = b2.reshape(1, GH).astype(jnp.float32)

    wo1h = wo1[:GH].astype(cd)                                     # [G*H, H]
    wo1n = (jnp.zeros((NONHIST_PAD, H), jnp.float32)
            .at[:NUM_NORMAL].set(wo1[GH:]).astype(cd))             # [NONHIST_PAD, H]
    bo1p = bo1.reshape(1, H).astype(jnp.float32)

    wo2p = (jnp.zeros((H, OUT_PAD), jnp.float32)
            .at[:, :O].set(wo2).astype(cd))                        # [H, OUT_PAD]
    bo2p = jnp.zeros((1, OUT_PAD), jnp.float32).at[0, :O].set(bo2)

    # mask expansion selector: E[g, g*H:(g+1)*H] = 1
    e = (jnp.arange(GH)[None, :] // H == jnp.arange(G)[:, None]).astype(jnp.float32)

    return dict(w1bd=w1bd, bh1=bh1, w2bd=w2bd, bh2=bh2,
                wo1h=wo1h, wo1n=wo1n, bo1=bo1p, wo2p=wo2p, bo2p=bo2p, e=e)


# ---------------------------------------------------------------------------
# Per-call forward (jitted): cheap input layout + one gridded pallas_call
# ---------------------------------------------------------------------------
@functools.partial(jax.jit, static_argnames=("num_outputs",))
def workload_forward(nonhist, dists, masks, packed, *, num_outputs):
    G, B, S, L = dists.shape
    GL = G * L
    GH = packed["w1bd"].shape[1]
    H = GH // G
    cd = packed["w1bd"].dtype

    # input-dependent layout plumbing (stays per-call; no H-broadcast of the mask)
    x = jnp.transpose(dists, (1, 2, 0, 3)).reshape(B * S, GL).astype(cd)
    # compact normalized mask [B*S, G]; 1/sum(mask) folded in (mask must have a nonzero
    # sum per (g, b) sample -- same precondition as the PyTorch module).
    mn = jnp.transpose(masks / jnp.sum(masks, axis=2, keepdims=True), (1, 2, 0))
    mn = mn.reshape(B * S, G).astype(jnp.float32)
    nh = jnp.zeros((B, NONHIST_PAD), cd).at[:, :NUM_NORMAL].set(nonhist.astype(cd))

    # batch grid: data streams advance with the grid, weights stay VMEM-resident
    bb = 8 if (B % 8 == 0) else B       # batch block (keeps sublane alignment)
    nblk = B // bb
    rows = bb * S
    # TODO(synk): for very large S, add an S grid axis ("arbitrary") with a VMEM feats
    # accumulator so x/mn stream in S tiles instead of whole-S blocks; size blocks against
    # v7x's 64 MiB VMEM and raise vmem_limit_bytes via pltpu.CompilerParams if needed.

    in_specs = [
        pl.BlockSpec((rows, GL), lambda i: (i, 0)),           # x          (streams)
        pl.BlockSpec((rows, G), lambda i: (i, 0)),            # mn compact (streams)
        pl.BlockSpec((G, GH), lambda i: (0, 0)),              # E          (resident)
        pl.BlockSpec((bb, NONHIST_PAD), lambda i: (i, 0)),    # nonhist    (streams)
        pl.BlockSpec((GL, GH), lambda i: (0, 0)),             # w1 block-diag
        pl.BlockSpec((1, GH), lambda i: (0, 0)),              # b1
        pl.BlockSpec((GH, GH), lambda i: (0, 0)),             # w2 block-diag
        pl.BlockSpec((1, GH), lambda i: (0, 0)),              # b2
        pl.BlockSpec((GH, H), lambda i: (0, 0)),              # out_mlp1 (hist rows)
        pl.BlockSpec((NONHIST_PAD, H), lambda i: (0, 0)),     # out_mlp1 (nonhist rows)
        pl.BlockSpec((1, H), lambda i: (0, 0)),               # bo1
        pl.BlockSpec((H, OUT_PAD), lambda i: (0, 0)),         # out_mlp2 (padded)
        pl.BlockSpec((1, OUT_PAD), lambda i: (0, 0)),         # bo2 (padded)
    ]
    out_specs = pl.BlockSpec((bb, OUT_PAD), lambda i: (i, 0))

    out = pl.pallas_call(
        workload_kernel,
        out_shape=jax.ShapeDtypeStruct((B, OUT_PAD), jnp.float32),
        grid=(nblk,),
        in_specs=in_specs,
        out_specs=out_specs,
        compiler_params=pltpu.CompilerParams(dimension_semantics=("parallel",)),
    )(x, mn, packed["e"], nh,
      packed["w1bd"], packed["bh1"], packed["w2bd"], packed["bh2"],
      packed["wo1h"], packed["wo1n"], packed["bo1"],
      packed["wo2p"], packed["bo2p"])

    return out[:, :num_outputs]


# ---------------------------------------------------------------------------
# Pure-JAX reference (faithful translation of the PyTorch module when
# compute_dtype=float32; compute_dtype=bfloat16 mirrors the kernel's rounding points)
# ---------------------------------------------------------------------------
def reference_forward(nonhist, dists, masks, params, compute_dtype=jnp.float32):
    w1, b1, w2, b2, wo1, bo1, wo2, bo2 = params
    cd = compute_dtype
    feats = []
    for g in range(NUM_HIST):
        h = _leaky(jnp.dot(dists[g].astype(cd), w1[g].astype(cd),
                           preferred_element_type=jnp.float32) + b1[g])
        h = _leaky(jnp.dot(h.astype(cd), w2[g].astype(cd),
                           preferred_element_type=jnp.float32) + b2[g])
        h = h * masks[g][:, :, None]
        feats.append(jnp.sum(h, axis=1) / jnp.sum(masks[g], axis=1, keepdims=True))
    cat = jnp.concatenate(feats + [nonhist], axis=1)
    c = _leaky(jnp.dot(cat.astype(cd), wo1.astype(cd),
                       preferred_element_type=jnp.float32) + bo1)
    return jnp.dot(c.astype(cd), wo2.astype(cd),
                   preferred_element_type=jnp.float32) + bo2


def init_params(key, hist_length, hid_units, num_outputs):
    """Deterministic torch.nn.Linear-style init (uniform +-1/sqrt(fan_in))."""
    def lin(k, fan_in, shape):
        bound = 1.0 / jnp.sqrt(fan_in)
        return jax.random.uniform(k, shape, jnp.float32, -bound, bound)

    ks = jax.random.split(key, 8)
    w1 = lin(ks[0], hist_length, (NUM_HIST, hist_length, hid_units))
    b1 = lin(ks[1], hist_length, (NUM_HIST, hid_units))
    w2 = lin(ks[2], hid_units, (NUM_HIST, hid_units, hid_units))
    b2 = lin(ks[3], hid_units, (NUM_HIST, hid_units))
    cat_dim = hid_units * NUM_HIST + NUM_NORMAL
    wo1 = lin(ks[4], cat_dim, (cat_dim, hid_units))
    bo1 = lin(ks[5], cat_dim, (hid_units,))
    wo2 = lin(ks[6], hid_units, (hid_units, num_outputs))
    bo2 = lin(ks[7], hid_units, (num_outputs,))
    return (w1, b1, w2, b2, wo1, bo1, wo2, bo2)


if __name__ == "__main__":
    B, S = 2, 8                 # batch, sets per sample
    HIST_LEN = 16               # hist_length
    HID = 32                    # hid_units
    NUM_OUT = 4                 # num_outputs

    key = jax.random.PRNGKey(0)
    k_param, k_nonhist, k_dist, k_mask = jax.random.split(key, 4)

    params = init_params(k_param, HIST_LEN, HID, NUM_OUT)

    nonhist = jax.random.normal(k_nonhist, (B, NUM_NORMAL), jnp.float32)
    dists = jax.random.normal(k_dist, (NUM_HIST, B, S, HIST_LEN), jnp.float32)
    masks = (jax.random.uniform(k_mask, (NUM_HIST, B, S)) > 0.3).astype(jnp.float32)
    masks = masks.at[:, :, 0].set(1.0)   # guarantee a nonzero mask sum per sample

    # one-time packing (hoisted out of the per-call path)
    packed = prepare_params(params, compute_dtype=jnp.bfloat16)

    out = workload_forward(nonhist, dists, masks, packed, num_outputs=NUM_OUT)
    out = jax.block_until_ready(out)

    ref_bf16 = reference_forward(nonhist, dists, masks, params, jnp.bfloat16)
    ref_f32 = reference_forward(nonhist, dists, masks, params, jnp.float32)

    assert out.shape == (B, NUM_OUT)
    assert jnp.allclose(out, ref_bf16, atol=2e-3, rtol=2e-3), (out, ref_bf16)
    assert jnp.allclose(out, ref_f32, atol=5e-2, rtol=5e-2), (out, ref_f32)
    print("KERNEL_OK")
</pallas_src>

<mosaic_0001>
module attributes {stable_mosaic.version = 11 : i64} {
  func.func @workload_kernel(%arg0: i32, %arg1: memref<16x80xbf16, #tpu.memory_space<vmem>>, %arg2: memref<16x5xf32, #tpu.memory_space<vmem>>, %arg3: memref<5x160xf32, #tpu.memory_space<vmem>>, %arg4: memref<2x16xbf16, #tpu.memory_space<vmem>>, %arg5: memref<80x160xbf16, #tpu.memory_space<vmem>>, %arg6: memref<1x160xf32, #tpu.memory_space<vmem>>, %arg7: memref<160x160xbf16, #tpu.memory_space<vmem>>, %arg8: memref<1x160xf32, #tpu.memory_space<vmem>>, %arg9: memref<160x32xbf16, #tpu.memory_space<vmem>>, %arg10: memref<16x32xbf16, #tpu.memory_space<vmem>>, %arg11: memref<1x32xf32, #tpu.memory_space<vmem>>, %arg12: memref<32x128xbf16, #tpu.memory_space<vmem>>, %arg13: memref<1x128xf32, #tpu.memory_space<vmem>>, %arg14: memref<2x128xf32, #tpu.memory_space<vmem>>) attributes {dimension_semantics = [#tpu.dimension_semantics<parallel>], iteration_bounds = array<i64: 1>, scalar_prefetch = 0 : i64, scratch_operands = 0 : i64, tpu.core_type = #tpu.core_type<tc>, window_params = [{transform_indices = @transform_0, window_bounds = array<i64: 16, 80>}, {transform_indices = @transform_1, window_bounds = array<i64: 16, 5>}, {pipeline_mode = #tpu.pipeline_mode<synchronous>, transform_indices = @transform_2, window_bounds = array<i64: 5, 160>}, {transform_indices = @transform_3, window_bounds = array<i64: 2, 16>}, {pipeline_mode = #tpu.pipeline_mode<synchronous>, transform_indices = @transform_4, window_bounds = array<i64: 80, 160>}, {pipeline_mode = #tpu.pipeline_mode<synchronous>, transform_indices = @transform_5, window_bounds = array<i64: 1, 160>}, {pipeline_mode = #tpu.pipeline_mode<synchronous>, transform_indices = @transform_6, window_bounds = array<i64: 160, 160>}, {pipeline_mode = #tpu.pipeline_mode<synchronous>, transform_indices = @transform_7, window_bounds = array<i64: 1, 160>}, {pipeline_mode = #tpu.pipeline_mode<synchronous>, transform_indices = @transform_8, window_bounds = array<i64: 160, 32>}, {pipeline_mode = #tpu.pipeline_mode<synchronous>, transform_indices = @transform_9, window_bounds = array<i64: 16, 32>}, {pipeline_mode = #tpu.pipeline_mode<synchronous>, transform_indices = @transform_10, window_bounds = array<i64: 1, 32>}, {pipeline_mode = #tpu.pipeline_mode<synchronous>, transform_indices = @transform_11, window_bounds = array<i64: 32, 128>}, {pipeline_mode = #tpu.pipeline_mode<synchronous>, transform_indices = @transform_12, window_bounds = array<i64: 1, 128>}, {transform_indices = @transform_13, window_bounds = array<i64: 2, 128>}]} {
    %c0 = arith.constant 0 : index
    %c0_0 = arith.constant 0 : index
    %0 = vector.load %arg1[%c0, %c0_0] : memref<16x80xbf16, #tpu.memory_space<vmem>>, vector<16x80xbf16>
    %c0_1 = arith.constant 0 : index
    %c0_2 = arith.constant 0 : index
    %1 = vector.load %arg5[%c0_1, %c0_2] : memref<80x160xbf16, #tpu.memory_space<vmem>>, vector<80x160xbf16>
    %cst = arith.constant dense<0.000000e+00> : vector<16x160xf32>
    %2 = tpu.matmul %0, %1, %cst {dimension_numbers = #tpu.dot_dimension_numbers<[1], [0], [0], [1], [0, 0, 1, 1], [], []>} : vector<16x80xbf16>, vector<80x160xbf16>, vector<16x160xf32> -> vector<16x160xf32>
    %c0_3 = arith.constant 0 : index
    %c0_4 = arith.constant 0 : index
    %3 = vector.load %arg6[%c0_3, %c0_4] : memref<1x160xf32, #tpu.memory_space<vmem>>, vector<1x160xf32>
    %4 = vector.broadcast %3 : vector<1x160xf32> to vector<16x160xf32>
    %5 = arith.addf %2, %4 : vector<16x160xf32>
    %cst_5 = arith.constant 0.000000e+00 : f32
    %6 = vector.broadcast %cst_5 : f32 to vector<16x160xf32>
    %7 = arith.cmpf oge, %5, %6 : vector<16x160xf32>
    %cst_6 = arith.constant 0.00999999977 : f32
    %8 = vector.broadcast %cst_6 : f32 to vector<16x160xf32>
    %9 = arith.mulf %8, %5 : vector<16x160xf32>
    %10 = arith.select %7, %5, %9 : vector<16x160xi1>, vector<16x160xf32>
    %11 = arith.truncf %10 : vector<16x160xf32> to vector<16x160xbf16>
    %c0_7 = arith.constant 0 : index
    %c0_8 = arith.constant 0 : index
    %12 = vector.load %arg7[%c0_7, %c0_8] : memref<160x160xbf16, #tpu.memory_space<vmem>>, vector<160x160xbf16>
    %cst_9 = arith.constant dense<0.000000e+00> : vector<16x160xf32>
    %13 = tpu.matmul %11, %12, %cst_9 {dimension_numbers = #tpu.dot_dimension_numbers<[1], [0], [0], [1], [0, 0, 1, 1], [], []>} : vector<16x160xbf16>, vector<160x160xbf16>, vector<16x160xf32> -> vector<16x160xf32>
    %c0_10 = arith.constant 0 : index
    %c0_11 = arith.constant 0 : index
    %14 = vector.load %arg8[%c0_10, %c0_11] : memref<1x160xf32, #tpu.memory_space<vmem>>, vector<1x160xf32>
    %15 = vector.broadcast %14 : vector<1x160xf32> to vector<16x160xf32>
    %16 = arith.addf %13, %15 : vector<16x160xf32>
    %cst_12 = arith.constant 0.000000e+00 : f32
    %17 = vector.broadcast %cst_12 : f32 to vector<16x160xf32>
    %18 = arith.cmpf oge, %16, %17 : vector<16x160xf32>
    %cst_13 = arith.constant 0.00999999977 : f32
    %19 = vector.broadcast %cst_13 : f32 to vector<16x160xf32>
    %20 = arith.mulf %19, %16 : vector<16x160xf32>
    %21 = arith.select %18, %16, %20 : vector<16x160xi1>, vector<16x160xf32>
    %c0_14 = arith.constant 0 : index
    %c0_15 = arith.constant 0 : index
    %22 = vector.load %arg2[%c0_14, %c0_15] : memref<16x5xf32, #tpu.memory_space<vmem>>, vector<16x5xf32>
    %c0_16 = arith.constant 0 : index
    %c0_17 = arith.constant 0 : index
    %23 = vector.load %arg3[%c0_16, %c0_17] : memref<5x160xf32, #tpu.memory_space<vmem>>, vector<5x160xf32>
    %cst_18 = arith.constant dense<0.000000e+00> : vector<16x160xf32>
    %24 = tpu.matmul %22, %23, %cst_18 {dimension_numbers = #tpu.dot_dimension_numbers<[1], [0], [0], [1], [0, 0, 1, 1], [], []>} : vector<16x5xf32>, vector<5x160xf32>, vector<16x160xf32> -> vector<16x160xf32>
    %25 = arith.mulf %21, %24 : vector<16x160xf32>
    %26 = tpu.iota {dimensions = array<i32: 1>} : vector<2x16xi32>
    %27 = tpu.iota {dimensions = array<i32: 0>} : vector<2x16xi32>
    %c8_i32 = arith.constant 8 : i32
    %28 = vector.broadcast %c8_i32 : i32 to vector<2x16xi32>
    %29 = arith.muli %27, %28 : vector<2x16xi32>
    %30 = arith.cmpi sge, %26, %29 : vector<2x16xi32>
    %c1_i32 = arith.constant 1 : i32
    %31 = vector.broadcast %c1_i32 : i32 to vector<2x16xi32>
    %32 = arith.addi %27, %31 : vector<2x16xi32>
    %c8_i32_19 = arith.constant 8 : i32
    %33 = vector.broadcast %c8_i32_19 : i32 to vector<2x16xi32>
    %34 = arith.muli %32, %33 : vector<2x16xi32>
    %35 = arith.cmpi slt, %26, %34 : vector<2x16xi32>
    %36 = arith.andi %30, %35 : vector<2x16xi1>
    %37 = arith.extui %36 : vector<2x16xi1> to vector<2x16xi32>
    %38 = arith.sitofp %37 : vector<2x16xi32> to vector<2x16xf32>
    %cst_20 = arith.constant dense<0.000000e+00> : vector<2x160xf32>
    %39 = tpu.matmul %38, %25, %cst_20 {dimension_numbers = #tpu.dot_dimension_numbers<[1], [0], [0], [1], [0, 0, 1, 1], [], []>} : vector<2x16xf32>, vector<16x160xf32>, vector<2x160xf32> -> vector<2x160xf32>
    %40 = arith.truncf %39 : vector<2x160xf32> to vector<2x160xbf16>
    %c0_21 = arith.constant 0 : index
    %c0_22 = arith.constant 0 : index
    %41 = vector.load %arg9[%c0_21, %c0_22] : memref<160x32xbf16, #tpu.memory_space<vmem>>, vector<160x32xbf16>
    %cst_23 = arith.constant dense<0.000000e+00> : vector<2x32xf32>
    %42 = tpu.matmul %40, %41, %cst_23 {dimension_numbers = #tpu.dot_dimension_numbers<[1], [0], [0], [1], [0, 0, 1, 1], [], []>} : vector<2x160xbf16>, vector<160x32xbf16>, vector<2x32xf32> -> vector<2x32xf32>
    %c0_24 = arith.constant 0 : index
    %c0_25 = arith.constant 0 : index
    %43 = vector.load %arg4[%c0_24, %c0_25] : memref<2x16xbf16, #tpu.memory_space<vmem>>, vector<2x16xbf16>
    %c0_26 = arith.constant 0 : index
    %c0_27 = arith.constant 0 : index
    %44 = vector.load %arg10[%c0_26, %c0_27] : memref<16x32xbf16, #tpu.memory_space<vmem>>, vector<16x32xbf16>
    %cst_28 = arith.constant dense<0.000000e+00> : vector<2x32xf32>
    %45 = tpu.matmul %43, %44, %cst_28 {dimension_numbers = #tpu.dot_dimension_numbers<[1], [0], [0], [1], [0, 0, 1, 1], [], []>} : vector<2x16xbf16>, vector<16x32xbf16>, vector<2x32xf32> -> vector<2x32xf32>
    %46 = arith.addf %42, %45 : vector<2x32xf32>
    %c0_29 = arith.constant 0 : index
    %c0_30 = arith.constant 0 : index
    %47 = vector.load %arg11[%c0_29, %c0_30] : memref<1x32xf32, #tpu.memory_space<vmem>>, vector<1x32xf32>
    %48 = vector.broadcast %47 : vector<1x32xf32> to vector<2x32xf32>
    %49 = arith.addf %46, %48 : vector<2x32xf32>
    %cst_31 = arith.constant 0.000000e+00 : f32
    %50 = vector.broadcast %cst_31 : f32 to vector<2x32xf32>
    %51 = arith.cmpf oge, %49, %50 : vector<2x32xf32>
    %cst_32 = arith.constant 0.00999999977 : f32
    %52 = vector.broadcast %cst_32 : f32 to vector<2x32xf32>
    %53 = arith.mulf %52, %49 : vector<2x32xf32>
    %54 = arith.select %51, %49, %53 : vector<2x32xi1>, vector<2x32xf32>
    %55 = arith.truncf %54 : vector<2x32xf32> to vector<2x32xbf16>
    %c0_33 = arith.constant 0 : index
    %c0_34 = arith.constant 0 : index
    %56 = vector.load %arg12[%c0_33, %c0_34] : memref<32x128xbf16, #tpu.memory_space<vmem>>, vector<32x128xbf16>
    %cst_35 = arith.constant dense<0.000000e+00> : vector<2x128xf32>
    %57 = tpu.matmul %55, %56, %cst_35 {dimension_numbers = #tpu.dot_dimension_numbers<[1], [0], [0], [1], [0, 0, 1, 1], [], []>} : vector<2x32xbf16>, vector<32x128xbf16>, vector<2x128xf32> -> vector<2x128xf32>
    %c0_36 = arith.constant 0 : index
    %c0_37 = arith.constant 0 : index
    %58 = vector.load %arg13[%c0_36, %c0_37] : memref<1x128xf32, #tpu.memory_space<vmem>>, vector<1x128xf32>
    %59 = vector.broadcast %58 : vector<1x128xf32> to vector<2x128xf32>
    %60 = arith.addf %57, %59 : vector<2x128xf32>
    %c0_38 = arith.constant 0 : index
    %c0_39 = arith.constant 0 : index
    %61 = vector.load %arg14[%c0_38, %c0_39] : memref<2x128xf32, #tpu.memory_space<vmem>>, vector<2x128xf32>
    tpu.vector_store %arg14[%c0_38, %c0_39], %60 {strides = array<i32>} : memref<2x128xf32, #tpu.memory_space<vmem>>, vector<2x128xf32>,
    return
  }
  func.func @transform_0(%arg0: i32) -> (i32, i32) {
    %c0_i32 = arith.constant 0 : i32
    %c0_i32_0 = arith.constant 0 : i32
    return %arg0, %c0_i32 : i32, i32
  }
  func.func @transform_1(%arg0: i32) -> (i32, i32) {
    %c0_i32 = arith.constant 0 : i32
    %c0_i32_0 = arith.constant 0 : i32
    return %arg0, %c0_i32 : i32, i32
  }
  func.func @transform_2(%arg0: i32) -> (i32, i32) {
    %c0_i32 = arith.constant 0 : i32
    %c0_i32_0 = arith.constant 0 : i32
    %c0_i32_1 = arith.constant 0 : i32
    return %c0_i32, %c0_i32_0 : i32, i32
  }
  func.func @transform_3(%arg0: i32) -> (i32, i32) {
    %c0_i32 = arith.constant 0 : i32
    %c0_i32_0 = arith.constant 0 : i32
    return %arg0, %c0_i32 : i32, i32
  }
  func.func @transform_4(%arg0: i32) -> (i32, i32) {
    %c0_i32 = arith.constant 0 : i32
    %c0_i32_0 = arith.constant 0 : i32
    %c0_i32_1 = arith.constant 0 : i32
    return %c0_i32, %c0_i32_0 : i32, i32
  }
  func.func @transform_5(%arg0: i32) -> (i32, i32) {
    %c0_i32 = arith.constant 0 : i32
    %c0_i32_0 = arith.constant 0 : i32
    %c0_i32_1 = arith.constant 0 : i32
    return %c0_i32, %c0_i32_0 : i32, i32
  }
  func.func @transform_6(%arg0: i32) -> (i32, i32) {
    %c0_i32 = arith.constant 0 : i32
    %c0_i32_0 = arith.constant 0 : i32
    %c0_i32_1 = arith.constant 0 : i32
    return %c0_i32, %c0_i32_0 : i32, i32
  }
  func.func @transform_7(%arg0: i32) -> (i32, i32) {
    %c0_i32 = arith.constant 0 : i32
    %c0_i32_0 = arith.constant 0 : i32
    %c0_i32_1 = arith.constant 0 : i32
    return %c0_i32, %c0_i32_0 : i32, i32
  }
  func.func @transform_8(%arg0: i32) -> (i32, i32) {
    %c0_i32 = arith.constant 0 : i32
    %c0_i32_0 = arith.constant 0 : i32
    %c0_i32_1 = arith.constant 0 : i32
    return %c0_i32, %c0_i32_0 : i32, i32
  }
  func.func @transform_9(%arg0: i32) -> (i32, i32) {
    %c0_i32 = arith.constant 0 : i32
    %c0_i32_0 = arith.constant 0 : i32
    %c0_i32_1 = arith.constant 0 : i32
    return %c0_i32, %c0_i32_0 : i32, i32
  }
  func.func @transform_10(%arg0: i32) -> (i32, i32) {
    %c0_i32 = arith.constant 0 : i32
    %c0_i32_0 = arith.constant 0 : i32
    %c0_i32_1 = arith.constant 0 : i32
    return %c0_i32, %c0_i32_0 : i32, i32
  }
  func.func @transform_11(%arg0: i32) -> (i32, i32) {
    %c0_i32 = arith.constant 0 : i32
    %c0_i32_0 = arith.constant 0 : i32
    %c0_i32_1 = arith.constant 0 : i32
    return %c0_i32, %c0_i32_0 : i32, i32
  }
  func.func @transform_12(%arg0: i32) -> (i32, i32) {
    %c0_i32 = arith.constant 0 : i32
    %c0_i32_0 = arith.constant 0 : i32
    %c0_i32_1 = arith.constant 0 : i32
    return %c0_i32, %c0_i32_0 : i32, i32
  }
  func.func @transform_13(%arg0: i32) -> (i32, i32) {
    %c0_i32 = arith.constant 0 : i32
    %c0_i32_0 = arith.constant 0 : i32
    return %arg0, %c0_i32 : i32, i32
  }
}

</mosaic_0001>

<llo_original>
// kernel: workload_forward.1
$region0: #{workload_forward.1}
  #allocation0 [shape = 'u32[]', space=smem, size = 0x4, offset = 0x4, fixed_abs, tag = 'smem constant byte address 0x4 - core index']
  #allocation1 [shape = 'u32[144,128]{1,0:T(1,128)}', space=vmem, size = 0x12000, scoped, tag = 'internal scratch']
  %s0 = inlined_call_operand.vmem [shape: bf16[16,80], index: 0, kind: input, shape index: {}]
  %s1 = inlined_call_operand.vmem [shape: f32[16,5], index: 1, kind: input, shape index: {}]
  %s2 = inlined_call_operand.vmem [shape: f32[5,160], index: 2, kind: input, shape index: {}]
  %s3 = inlined_call_operand.vmem [shape: bf16[2,16], index: 3, kind: input, shape index: {}]
  %s4 = inlined_call_operand.vmem [shape: bf16[80,160], index: 4, kind: input, shape index: {}]
  %s5 = inlined_call_operand.vmem [shape: f32[1,160], index: 5, kind: input, shape index: {}]
  %s6 = inlined_call_operand.vmem [shape: bf16[160,160], index: 6, kind: input, shape index: {}]
  %s7 = inlined_call_operand.vmem [shape: f32[1,160], index: 7, kind: input, shape index: {}]
  %s8 = inlined_call_operand.vmem [shape: bf16[160,32], index: 8, kind: input, shape index: {}]
  %s9 = inlined_call_operand.vmem [shape: bf16[16,32], index: 9, kind: input, shape index: {}]
  %s10 = inlined_call_operand.vmem [shape: f32[1,32], index: 10, kind: input, shape index: {}]
  %s11 = inlined_call_operand.vmem [shape: bf16[32,128], index: 11, kind: input, shape index: {}]
  %s12 = inlined_call_operand.vmem [shape: f32[1,128], index: 12, kind: input, shape index: {}]
  %s13 = inlined_call_operand.hbm [shape: f32[2,128], index: 13, kind: output, shape index: {}]
  %s14 = sld [smem:[#allocation0]]
  $region62: #{workload_forward.1} parent=0
    _
  %s16 = ssub.s32 1, %s14
  %s17 = scalar_select 0, %s16, %s14
  $region1: #{workload_forward.1} parent=0
    #allocation2 [shape = 'u8[1024]{0}', space=vmem, size = 0x400, scoped, tag = 'output window, operand 0, single buffered']
    #allocation3 [shape = 's32[1]{0}', space=sflag, size = 0x4, scoped, tag = 'scoped memory for workload_forward.1']
    %18 = vsyncpa [#allocation3], 0
    // Predicated region
    $region2: #{workload_forward.1} parent=1 // pred_check
      _
    $region3: #{workload_forward.1} parent=1 // pred_check_branch
      %20 = sbr.rel (0) target = $region5
    $region4: #{workload_forward.1} parent=1 // pred_region
      _
    $region5: #{workload_forward.1} parent=1 // pred_fallthru
      _
    // Predicated region
    $region6: #{workload_forward.1} parent=1 // pred_check
      _
    $region7: #{workload_forward.1} parent=1 // pred_check_branch
      %22 = sbr.rel (0) target = $region9
    $region8: #{workload_forward.1} parent=1 // pred_region
      _
    $region9: #{workload_forward.1} parent=1 // pred_fallthru
      _
    // Predicated region
    $region10: #{workload_forward.1} parent=1 // pred_check
      _
    $region11: #{workload_forward.1} parent=1 // pred_check_branch
      %24 = sbr.rel (0) target = $region13
    $region12: #{workload_forward.1} parent=1 // pred_region
      _
    $region13: #{workload_forward.1} parent=1 // pred_fallthru
      _
    // Predicated region
    $region14: #{workload_forward.1} parent=1 // pred_check
      _
    $region15: #{workload_forward.1} parent=1 // pred_check_branch
      %26 = sbr.rel (0) target = $region17
    $region16: #{workload_forward.1} parent=1 // pred_region
      _
    $region17: #{workload_forward.1} parent=1 // pred_fallthru
      _
    // Predicated region
    $region18: #{workload_forward.1} parent=1 // pred_check
      _
    $region19: #{workload_forward.1} parent=1 // pred_check_branch
      %28 = sbr.rel (0) target = $region21
    $region20: #{workload_forward.1} parent=1 // pred_region
      _
    $region21: #{workload_forward.1} parent=1 // pred_fallthru
      _
    // Predicated region
    $region22: #{workload_forward.1} parent=1 // pred_check
      _
    $region23: #{workload_forward.1} parent=1 // pred_check_branch
      %30 = sbr.rel (0) target = $region25
    $region24: #{workload_forward.1} parent=1 // pred_region
      _
    $region25: #{workload_forward.1} parent=1 // pred_fallthru
      _
    // Predicated region
    $region26: #{workload_forward.1} parent=1 // pred_check
      _
    $region27: #{workload_forward.1} parent=1 // pred_check_branch
      %32 = sbr.rel (0) target = $region29
    $region28: #{workload_forward.1} parent=1 // pred_region
      _
    $region29: #{workload_forward.1} parent=1 // pred_fallthru
      _
    // Predicated region
    $region30: #{workload_forward.1} parent=1 // pred_check
      _
    $region31: #{workload_forward.1} parent=1 // pred_check_branch
      %34 = sbr.rel (0) target = $region33
    $region32: #{workload_forward.1} parent=1 // pred_region
      _
    $region33: #{workload_forward.1} parent=1 // pred_fallthru
      _
    // Predicated region
    $region34: #{workload_forward.1} parent=1 // pred_check
      _
    $region35: #{workload_forward.1} parent=1 // pred_check_branch
      %36 = sbr.rel (0) target = $region37
    $region36: #{workload_forward.1} parent=1 // pred_region
      _
    $region37: #{workload_forward.1} parent=1 // pred_fallthru
      _
    // Predicated region
    $region38: #{workload_forward.1} parent=1 // pred_check
      _
    $region39: #{workload_forward.1} parent=1 // pred_check_branch
      %38 = sbr.rel (0) target = $region41
    $region40: #{workload_forward.1} parent=1 // pred_region
      _
    $region41: #{workload_forward.1} parent=1 // pred_fallthru
      _
    // Predicated region
    $region42: #{workload_forward.1} parent=1 // pred_check
      _
    $region43: #{workload_forward.1} parent=1 // pred_check_branch
      %40 = sbr.rel (0) target = $region45
    $region44: #{workload_forward.1} parent=1 // pred_region
      _
    $region45: #{workload_forward.1} parent=1 // pred_fallthru
      _
    // Predicated region
    $region46: #{workload_forward.1} parent=1 // pred_check
      _
    $region47: #{workload_forward.1} parent=1 // pred_check_branch
      %42 = sbr.rel (0) target = $region49
    $region48: #{workload_forward.1} parent=1 // pred_region
      _
    $region49: #{workload_forward.1} parent=1 // pred_fallthru
      _
    // Predicated region
    $region50: #{workload_forward.1} parent=1 // pred_check
      _
    $region51: #{workload_forward.1} parent=1 // pred_check_branch
      %44 = sbr.rel (0) target = $region53
    $region52: #{workload_forward.1} parent=1 // pred_region
      _
    $region53: #{workload_forward.1} parent=1 // pred_fallthru
      _
    %v46 = vld [vmem:[%s0] sm:$0xf]
    %v47 = vld [vmem:[%s0 + $0x4] sm:$0xf]
    %v48 = vld [vmem:[%s4] sm:$0xff]
    %v49 = vld [vmem:[%s4 + $0x8] sm:$0xff]
    %v50 = vld [vmem:[%s4 + $0x10] sm:$0xff]
    %v51 = vld [vmem:[%s4 + $0x18] sm:$0xff]
    %v52 = vld [vmem:[%s4 + $0x20] sm:$0xff]
    %v53 = vld [vmem:[%s4 + $0x28] sm:$0xff]
    %v54 = vld [vmem:[%s4 + $0x30] sm:$0xff]
    %v55 = vld [vmem:[%s4 + $0x38] sm:$0xff]
    %v56 = vld [vmem:[%s4 + $0x40] sm:$0xff]
    %v57 = vld [vmem:[%s4 + $0x48] sm:$0xff]
    %v58 = vld [vmem:[%s5] sm:$0x3]
    %v60 = vlaneseq
    %v61 = vshrl.u32 %v60, 7
    %v62 = vsub.s32 0, %v61
    %v63 = vrot.slane %v58, %v62
    %v64 = vlaneseq
    %v65 = vshrl.u32 %v64, 7
    %v66 = vsub.s32 1, %v65
    %v67 = vrot.slane %v58, %v66
    %v72 = vunpack.c.l.b16 %v46
    %v73 = vunpack.c.l.b16 %v47
    %v74 = vpack.c.b16 %v73, %v72
    %v85 = vunpack.c.l.b16 %v48
    %v86 = vunpack.c.h.b16 %v48
    %v87 = vunpack.c.l.b16 %v49
    %v88 = vunpack.c.h.b16 %v49
    %v89 = vunpack.c.l.b16 %v50
    %v90 = vunpack.c.h.b16 %v50
    %v91 = vunpack.c.l.b16 %v51
    %v92 = vunpack.c.h.b16 %v51
    %v93 = vunpack.c.l.b16 %v52
    %v94 = vunpack.c.h.b16 %v52
    %v95 = vunpack.c.l.b16 %v53
    %v96 = vunpack.c.h.b16 %v53
    %v97 = vunpack.c.l.b16 %v54
    %v98 = vunpack.c.h.b16 %v54
    %v99 = vunpack.c.l.b16 %v55
    %v100 = vunpack.c.h.b16 %v55
    %v101 = vunpack.c.l.b16 %v56
    %v102 = vunpack.c.h.b16 %v56
    %v103 = vunpack.c.l.b16 %v57
    %v104 = vunpack.c.h.b16 %v57
    %v105 = vpack.c.b16 %v87, %v85
    %v106 = vpack.c.b16 %v88, %v86
    %v107 = vpack.c.b16 %v91, %v89
    %v108 = vpack.c.b16 %v92, %v90
    %v109 = vpack.c.b16 %v95, %v93
    %v110 = vpack.c.b16 %v96, %v94
    %v111 = vpack.c.b16 %v99, %v97
    %v112 = vpack.c.b16 %v100, %v98
    %v113 = vpack.c.b16 %v103, %v101
    %v114 = vpack.c.b16 %v104, %v102
    %vm125 = vcmask 654336
    %v127 = vsel %vm125, %v74, 0
    %129 = vmatprep.subr.bf16.mxu0 0
    %130 = vmatpush1.bf16.msra.mxu0 0
    %131 = vmatprep.subr.bf16.mxu0 0
    %132 = vmatpush1.bf16.msra.mxu0 0
    %133 = vmatprep.subr.bf16.mxu0 0
    %134 = vmatpush1.bf16.msra.mxu0 0
    %135 = vmatprep.subr.bf16.mxu0 %v114
    %136 = vmatpush1.bf16.msra.mxu0 %v113
    %137 = vmatprep.subr.bf16.mxu0 %v112
    %138 = vmatpush1.bf16.msra.mxu0 %v111
    %139 = vmatprep.subr.bf16.mxu0 %v110
    %140 = vmatpush1.bf16.msra.mxu0 %v109
    %141 = vmatprep.subr.bf16.mxu0 %v108
    %142 = vmatpush1.bf16.msra.mxu0 %v107
    %143 = vmatprep.subr.bf16.mxu0 %v106
    %144 = vmatpush1.bf16.msra.mxu0 %v105
    %145 = vmatprep.subr.bf16.mxu0 0
    %146 = vmatpush2.bf16.msra.mxu0 0
    %147 = vmatprep.subr.bf16.mxu0 0
    %148 = vmatpush2.bf16.msra.mxu0 0
    %149 = vmatprep.subr.bf16.mxu0 0
    %150 = vmatpush2.bf16.msra.mxu0 0
    %151 = vmatprep.subr.bf16.mxu0 0
    %152 = vmatpush2.bf16.msra.mxu0 0
    %153 = vmatprep.subr.bf16.mxu0 0
    %154 = vmatpush2.bf16.msra.mxu0 0
    %155 = vmatprep.subr.bf16.mxu0 0
    %156 = vmatpush2.bf16.msra.mxu0 0
    %157 = vmatprep.subr.bf16.mxu0 0
    %158 = vmatpush2.bf16.msra.mxu0 0
    %159 = vmatprep.subr.bf16.mxu0 0
    %160 = vmatpush2.bf16.msra.mxu0 0
    %161 = vmatprep.mubr.bf16.mxu0 0
    %162 = vmatmul.mubr.bf16.gmra.mxu0 %v127
    %v163 = vpop.f32.mrf.mxu0
    %v164 = vadd.f32 %v63, %v163
    %v165 = vpop.f32.mrf.mxu0
    %v166 = vadd.f32 %v67, %v165
    %v167 = vpop.f32.mrf.mxu0
    %v168 = vadd.f32 %v63, %v167
    %v169 = vpop.f32.mrf.mxu0
    %v170 = vadd.f32 %v67, %v169
    %171 = vdwg.mxu0
    %vm172 = vcmp.ge.f32.partialorder %v164, 0.0
    %vm173 = vcmp.ge.f32.partialorder %v166, 0.0
    %vm174 = vcmp.ge.f32.partialorder %v168, 0.0
    %vm175 = vcmp.ge.f32.partialorder %v170, 0.0
    %v176 = vmul.f32 %v164, 0.01
    %v177 = vmul.f32 %v166, 0.01
    %v178 = vmul.f32 %v168, 0.01
    %v179 = vmul.f32 %v170, 0.01
    %v180 = vsel %vm172, %v164, %v176
    %v181 = vsel %vm173, %v166, %v177
    %v182 = vsel %vm174, %v168, %v178
    %v183 = vsel %vm175, %v170, %v179
    %v184 = vpack.c.bf16 %v182, %v180
    %v185 = vpack.c.bf16 %v183, %v181
    %v186 = vld [vmem:[%s6] sm:$0xff]
    %v187 = vld [vmem:[%s6 + $0x8] sm:$0xff]
    %v188 = vld [vmem:[%s6 + $0x10] sm:$0xff]
    %v189 = vld [vmem:[%s6 + $0x18] sm:$0xff]
    %v190 = vld [vmem:[%s6 + $0x20] sm:$0xff]
    %v191 = vld [vmem:[%s6 + $0x28] sm:$0xff]
    %v192 = vld [vmem:[%s6 + $0x30] sm:$0xff]
    %v193 = vld [vmem:[%s6 + $0x38] sm:$0xff]
    %v194 = vld [vmem:[%s6 + $0x40] sm:$0xff]
    %v195 = vld [vmem:[%s6 + $0x48] sm:$0xff]
    %v196 = vld [vmem:[%s6 + $0x50] sm:$0xff]
    %v197 = vld [vmem:[%s6 + $0x58] sm:$0xff]
    %v198 = vld [vmem:[%s6 + $0x60] sm:$0xff]
    %v199 = vld [vmem:[%s6 + $0x68] sm:$0xff]
    %v200 = vld [vmem:[%s6 + $0x70] sm:$0xff]
    %v201 = vld [vmem:[%s6 + $0x78] sm:$0xff]
    %v202 = vld [vmem:[%s6 + $0x80] sm:$0xff]
    %v203 = vld [vmem:[%s6 + $0x88] sm:$0xff]
    %v204 = vld [vmem:[%s6 + $0x90] sm:$0xff]
    %v205 = vld [vmem:[%s6 + $0x98] sm:$0xff]
    %v206 = vld [vmem:[%s7] sm:$0x3]
    %v208 = vlaneseq
    %v209 = vshrl.u32 %v208, 7
    %v210 = vsub.s32 0, %v209
    %v211 = vrot.slane %v206, %v210
    %v212 = vlaneseq
    %v213 = vshrl.u32 %v212, 7
    %v214 = vsub.s32 1, %v213
    %v215 = vrot.slane %v206, %v214
    %v238 = vunpack.c.l.b16 %v186
    %v239 = vunpack.c.h.b16 %v186
    %v240 = vunpack.c.l.b16 %v187
    %v241 = vunpack.c.h.b16 %v187
    %v242 = vunpack.c.l.b16 %v188
    %v243 = vunpack.c.h.b16 %v188
    %v244 = vunpack.c.l.b16 %v189
    %v245 = vunpack.c.h.b16 %v189
    %v246 = vunpack.c.l.b16 %v190
    %v247 = vunpack.c.h.b16 %v190
    %v248 = vunpack.c.l.b16 %v191
    %v249 = vunpack.c.h.b16 %v191
    %v250 = vunpack.c.l.b16 %v192
    %v251 = vunpack.c.h.b16 %v192
    %v252 = vunpack.c.l.b16 %v193
    %v253 = vunpack.c.h.b16 %v193
    %v254 = vunpack.c.l.b16 %v194
    %v255 = vunpack.c.h.b16 %v194
    %v256 = vunpack.c.l.b16 %v195
    %v257 = vunpack.c.h.b16 %v195
    %v258 = vunpack.c.l.b16 %v196
    %v259 = vunpack.c.h.b16 %v196
    %v260 = vunpack.c.l.b16 %v197
    %v261 = vunpack.c.h.b16 %v197
    %v262 = vunpack.c.l.b16 %v198
    %v263 = vunpack.c.h.b16 %v198
    %v264 = vunpack.c.l.b16 %v199
    %v265 = vunpack.c.h.b16 %v199
    %v266 = vunpack.c.l.b16 %v200
    %v267 = vunpack.c.h.b16 %v200
    %v268 = vunpack.c.l.b16 %v201
    %v269 = vunpack.c.h.b16 %v201
    %v270 = vunpack.c.l.b16 %v202
    %v271 = vunpack.c.h.b16 %v202
    %v272 = vunpack.c.l.b16 %v203
    %v273 = vunpack.c.h.b16 %v203
    %v274 = vunpack.c.l.b16 %v204
    %v275 = vunpack.c.h.b16 %v204
    %v276 = vunpack.c.l.b16 %v205
    %v277 = vunpack.c.h.b16 %v205
    %v278 = vpack.c.b16 %v240, %v238
    %v279 = vpack.c.b16 %v241, %v239
    %v280 = vpack.c.b16 %v244, %v242
    %v281 = vpack.c.b16 %v245, %v243
    %v282 = vpack.c.b16 %v248, %v246
    %v283 = vpack.c.b16 %v249, %v247
    %v284 = vpack.c.b16 %v252, %v250
    %v285 = vpack.c.b16 %v253, %v251
    %v286 = vpack.c.b16 %v256, %v254
    %v287 = vpack.c.b16 %v257, %v255
    %v288 = vpack.c.b16 %v260, %v258
    %v289 = vpack.c.b16 %v261, %v259
    %v290 = vpack.c.b16 %v264, %v262
    %v291 = vpack.c.b16 %v265, %v263
    %v292 = vpack.c.b16 %v268, %v266
    %v293 = vpack.c.b16 %v269, %v267
    %v294 = vpack.c.b16 %v272, %v270
    %v295 = vpack.c.b16 %v273, %v271
    %v296 = vpack.c.b16 %v276, %v274
    %v297 = vpack.c.b16 %v277, %v275
    %vm318 = vcmask 261120
    %v320 = vsel %vm318, %v185, 0
    %322 = vmatprep.subr.bf16.mxu0 %v293
    %323 = vmatpush1.bf16.msra.mxu0 %v292
    %324 = vmatprep.subr.bf16.mxu0 %v291
    %325 = vmatpush1.bf16.msra.mxu0 %v290
    %326 = vmatprep.subr.bf16.mxu0 %v289
    %327 = vmatpush1.bf16.msra.mxu0 %v288
    %328 = vmatprep.subr.bf16.mxu0 %v287
    %329 = vmatpush1.bf16.msra.mxu0 %v286
    %330 = vmatprep.subr.bf16.mxu0 %v285
    %331 = vmatpush1.bf16.msra.mxu0 %v284
    %332 = vmatprep.subr.bf16.mxu0 %v283
    %333 = vmatpush1.bf16.msra.mxu0 %v282
    %334 = vmatprep.subr.bf16.mxu0 %v281
    %335 = vmatpush1.bf16.msra.mxu0 %v280
    %336 = vmatprep.subr.bf16.mxu0 %v279
    %337 = vmatpush1.bf16.msra.mxu0 %v278
    %338 = vmatprep.subr.bf16.mxu0 0
    %339 = vmatpush2.bf16.msra.mxu0 0
    %340 = vmatprep.subr.bf16.mxu0 0
    %341 = vmatpush2.bf16.msra.mxu0 0
    %342 = vmatprep.subr.bf16.mxu0 0
    %343 = vmatpush2.bf16.msra.mxu0 0
    %344 = vmatprep.subr.bf16.mxu0 0
    %345 = vmatpush2.bf16.msra.mxu0 0
    %346 = vmatprep.subr.bf16.mxu0 0
    %347 = vmatpush2.bf16.msra.mxu0 0
    %348 = vmatprep.subr.bf16.mxu0 0
    %349 = vmatpush2.bf16.msra.mxu0 0
    %350 = vmatprep.subr.bf16.mxu0 %v297
    %351 = vmatpush2.bf16.msra.mxu0 %v296
    %352 = vmatprep.subr.bf16.mxu0 %v295
    %353 = vmatpush2.bf16.msra.mxu0 %v294
    %354 = vmatprep.mubr.bf16.mxu0 %v320
    %355 = vmatmul.mubr.bf16.gmra.mxu0 %v184
    %v356 = vpop.f32.mrf.mxu0
    %v357 = vadd.f32 %v211, %v356
    %v358 = vpop.f32.mrf.mxu0
    %v359 = vadd.f32 %v215, %v358
    %v360 = vpop.f32.mrf.mxu0
    %v361 = vadd.f32 %v211, %v360
    %v362 = vpop.f32.mrf.mxu0
    %v363 = vadd.f32 %v215, %v362
    %364 = vdwg.mxu0
    %vm365 = vcmp.ge.f32.partialorder %v357, 0.0
    %vm366 = vcmp.ge.f32.partialorder %v359, 0.0
    %vm367 = vcmp.ge.f32.partialorder %v361, 0.0
    %vm368 = vcmp.ge.f32.partialorder %v363, 0.0
    %v369 = vmul.f32 %v357, 0.01
    %v370 = vmul.f32 %v359, 0.01
    %v371 = vmul.f32 %v361, 0.01
    %v372 = vmul.f32 %v363, 0.01
    %v373 = vsel %vm365, %v357, %v369
    %v374 = vsel %vm366, %v359, %v370
    %v375 = vsel %vm367, %v361, %v371
    %v376 = vsel %vm368, %v363, %v372
    %v377 = vld [vmem:[%s1] sm:$0xff]
    %v378 = vld [vmem:[%s1 + $0x8] sm:$0xff]
    %v379 = vld [vmem:[%s2] sm:$0x1f]
    %v380 = vld [vmem:[%s2 + $0x8] sm:$0x1f]
    %vm381 = vcmask 39936
    %v383 = vsel %vm381, %v377, 0
    %v386 = vsel %vm381, %v378, 0
    %vm388 = vcmask 1044480
    %v390 = vsel %vm388, %v379, 0
    %v393 = vsel %vm388, %v380, 0
    %395 = vmatprep.subr.mxu0 0.0
    %396 = vmatpush1.msra.mxu0 0.0
    %397 = vmatprep.subr.mxu0 0.0
    %398 = vmatpush1.msra.mxu0 0.0
    %399 = vmatprep.subr.mxu0 0.0
    %400 = vmatpush1.msra.mxu0 0.0
    %401 = vmatprep.subr.mxu0 0.0
    %402 = vmatpush1.msra.mxu0 0.0
    %403 = vmatprep.subr.mxu0 0.0
    %404 = vmatpush1.msra.mxu0 0.0
    %405 = vmatprep.subr.mxu0 0.0
    %406 = vmatpush1.msra.mxu0 0.0
    %407 = vmatprep.subr.mxu0 0.0
    %408 = vmatpush1.msra.mxu0 0.0
    %409 = vmatprep.subr.mxu0 0.0
    %410 = vmatpush1.msra.mxu0 0.0
    %411 = vmatprep.subr.mxu0 0.0
    %412 = vmatpush1.msra.mxu0 0.0
    %413 = vmatprep.subr.mxu0 0.0
    %414 = vmatpush1.msra.mxu0 0.0
    %415 = vmatprep.subr.mxu0 0.0
    %416 = vmatpush1.msra.mxu0 0.0
    %417 = vmatprep.subr.mxu0 0.0
    %418 = vmatpush1.msra.mxu0 0.0
    %419 = vmatprep.subr.mxu0 0.0
    %420 = vmatpush1.msra.mxu0 0.0
    %421 = vmatprep.subr.mxu0 0.0
    %422 = vmatpush1.msra.mxu0 0.0
    %423 = vmatprep.subr.mxu0 0.0
    %424 = vmatpush1.msra.mxu0 0.0
    %425 = vmatprep.subr.mxu0 %v393
    %426 = vmatpush1.msra.mxu0 %v390
    %427 = vmatprep.subr.mxu0 0.0
    %428 = vmatpush2.msra.mxu0 0.0
    %429 = vmatprep.subr.mxu0 0.0
    %430 = vmatpush2.msra.mxu0 0.0
    %431 = vmatprep.subr.mxu0 0.0
    %432 = vmatpush2.msra.mxu0 0.0
    %433 = vmatprep.subr.mxu0 0.0
    %434 = vmatpush2.msra.mxu0 0.0
    %435 = vmatprep.subr.mxu0 0.0
    %436 = vmatpush2.msra.mxu0 0.0
    %437 = vmatprep.subr.mxu0 0.0
    %438 = vmatpush2.msra.mxu0 0.0
    %439 = vmatprep.subr.mxu0 0.0
    %440 = vmatpush2.msra.mxu0 0.0
    %441 = vmatprep.subr.mxu0 0.0
    %442 = vmatpush2.msra.mxu0 0.0
    %443 = vmatprep.subr.mxu0 0.0
    %444 = vmatpush2.msra.mxu0 0.0
    %445 = vmatprep.subr.mxu0 0.0
    %446 = vmatpush2.msra.mxu0 0.0
    %447 = vmatprep.subr.mxu0 0.0
    %448 = vmatpush2.msra.mxu0 0.0
    %449 = vmatprep.subr.mxu0 0.0
    %450 = vmatpush2.msra.mxu0 0.0
    %451 = vmatprep.subr.mxu0 0.0
    %452 = vmatpush2.msra.mxu0 0.0
    %453 = vmatprep.subr.mxu0 0.0
    %454 = vmatpush2.msra.mxu0 0.0
    %455 = vmatprep.subr.mxu0 0.0
    %456 = vmatpush2.msra.mxu0 0.0
    %457 = vmatprep.subr.mxu0 0.0
    %458 = vmatpush2.msra.mxu0 0.0
    %459 = vmatprep.mubr.f32.mxu0 0.0
    %460 = vmatmul.mubr.f32.gmra.mxu0 %v383
    %v461 = vpop.f32.mrf.mxu0
    %v462 = vadd.f32 0.0, %v461
    %v463 = vpop.f32.mrf.mxu0
    %v464 = vadd.f32 0.0, %v463
    %465 = vmatprep.mubr.f32.mxu0 0.0
    %466 = vmatmul.mubr.f32.gmra.mxu0 %v386
    %v467 = vpop.f32.mrf.mxu0
    %v468 = vadd.f32 0.0, %v467
    %v469 = vpop.f32.mrf.mxu0
    %v470 = vadd.f32 0.0, %v469
    %471 = vdwg.mxu0
    %v472 = vmul.f32 %v373, %v462
    %v473 = vmul.f32 %v374, %v464
    %v474 = vmul.f32 %v375, %v468
    %v475 = vmul.f32 %v376, %v470
    %v476 = vlaneseq
    %v477 = vand.u32 %v476, 127
    %v478 = vlaneseq
    %v479 = vshrl.u32 %v478, 7
    %v480 = vmul.u32 %v479, 8
    %vm481 = vcmp.ge.s32.totalorder %v477, %v480
    %v482 = vadd.s32 %v479, 1
    %v483 = vmul.u32 %v482, 8
    %vm484 = vcmp.lt.s32.totalorder %v477, %v483
    %vm485 = vmand %vm481, %vm484
    %v486 = vsel %vm485, 1, 0
    %v487 = vcvt.s32.f32 %v486
    %vm488 = vcmask 130048
    %v490 = vsel %vm488, %v487, 0
    %492 = vmatprep.subr.mxu0 0.0
    %493 = vmatpush1.msra.mxu0 0.0
    %494 = vmatprep.subr.mxu0 0.0
    %495 = vmatpush1.msra.mxu0 0.0
    %496 = vmatprep.subr.mxu0 0.0
    %497 = vmatpush1.msra.mxu0 0.0
    %498 = vmatprep.subr.mxu0 0.0
    %499 = vmatpush1.msra.mxu0 0.0
    %500 = vmatprep.subr.mxu0 0.0
    %501 = vmatpush1.msra.mxu0 0.0
    %502 = vmatprep.subr.mxu0 0.0
    %503 = vmatpush1.msra.mxu0 0.0
    %504 = vmatprep.subr.mxu0 0.0
    %505 = vmatpush1.msra.mxu0 0.0
    %506 = vmatprep.subr.mxu0 0.0
    %507 = vmatpush1.msra.mxu0 0.0
    %508 = vmatprep.subr.mxu0 0.0
    %509 = vmatpush1.msra.mxu0 0.0
    %510 = vmatprep.subr.mxu0 0.0
    %511 = vmatpush1.msra.mxu0 0.0
    %512 = vmatprep.subr.mxu0 0.0
    %513 = vmatpush1.msra.mxu0 0.0
    %514 = vmatprep.subr.mxu0 0.0
    %515 = vmatpush1.msra.mxu0 0.0
    %516 = vmatprep.subr.mxu0 0.0
    %517 = vmatpush1.msra.mxu0 0.0
    %518 = vmatprep.subr.mxu0 0.0
    %519 = vmatpush1.msra.mxu0 0.0
    %520 = vmatprep.subr.mxu0 %v475
    %521 = vmatpush1.msra.mxu0 %v474
    %522 = vmatprep.subr.mxu0 %v473
    %523 = vmatpush1.msra.mxu0 %v472
    %524 = vmatprep.subr.mxu0 0.0
    %525 = vmatpush2.msra.mxu0 0.0
    %526 = vmatprep.subr.mxu0 0.0
    %527 = vmatpush2.msra.mxu0 0.0
    %528 = vmatprep.subr.mxu0 0.0
    %529 = vmatpush2.msra.mxu0 0.0
    %530 = vmatprep.subr.mxu0 0.0
    %531 = vmatpush2.msra.mxu0 0.0
    %532 = vmatprep.subr.mxu0 0.0
    %533 = vmatpush2.msra.mxu0 0.0
    %534 = vmatprep.subr.mxu0 0.0
    %535 = vmatpush2.msra.mxu0 0.0
    %536 = vmatprep.subr.mxu0 0.0
    %537 = vmatpush2.msra.mxu0 0.0
    %538 = vmatprep.subr.mxu0 0.0
    %539 = vmatpush2.msra.mxu0 0.0
    %540 = vmatprep.subr.mxu0 0.0
    %541 = vmatpush2.msra.mxu0 0.0
    %542 = vmatprep.subr.mxu0 0.0
    %543 = vmatpush2.msra.mxu0 0.0
    %544 = vmatprep.subr.mxu0 0.0
    %545 = vmatpush2.msra.mxu0 0.0
    %546 = vmatprep.subr.mxu0 0.0
    %547 = vmatpush2.msra.mxu0 0.0
    %548 = vmatprep.subr.mxu0 0.0
    %549 = vmatpush2.msra.mxu0 0.0
    %550 = vmatprep.subr.mxu0 0.0
    %551 = vmatpush2.msra.mxu0 0.0
    %552 = vmatprep.subr.mxu0 0.0
    %553 = vmatpush2.msra.mxu0 0.0
    %554 = vmatprep.subr.mxu0 0.0
    %555 = vmatpush2.msra.mxu0 0.0
    %556 = vmatprep.mubr.f32.mxu0 0.0
    %557 = vmatmul.mubr.f32.gmra.mxu0 %v490
    %v558 = vpop.f32.mrf.mxu0
    %v559 = vadd.f32 0.0, %v558
    %v560 = vpop.f32.mrf.mxu0
    %v561 = vadd.f32 0.0, %v560
    %562 = vdwg.mxu0
    %v563 = vpack.c.bf16 %v559, %v559
    %v564 = vpack.c.bf16 %v561, %v561
    %v565 = vld [vmem:[%s8] sm:$0xf]
    %v566 = vld [vmem:[%s8 + $0x4] sm:$0xf]
    %v567 = vld [vmem:[%s8 + $0x8] sm:$0xf]
    %v568 = vld [vmem:[%s8 + $0xc] sm:$0xf]
    %v569 = vld [vmem:[%s8 + $0x10] sm:$0xf]
    %v570 = vld [vmem:[%s8 + $0x14] sm:$0xf]
    %v571 = vld [vmem:[%s8 + $0x18] sm:$0xf]
    %v572 = vld [vmem:[%s8 + $0x1c] sm:$0xf]
    %v573 = vld [vmem:[%s8 + $0x20] sm:$0xf]
    %v574 = vld [vmem:[%s8 + $0x24] sm:$0xf]
    %v575 = vld [vmem:[%s8 + $0x28] sm:$0xf]
    %v576 = vld [vmem:[%s8 + $0x2c] sm:$0xf]
    %v577 = vld [vmem:[%s8 + $0x30] sm:$0xf]
    %v578 = vld [vmem:[%s8 + $0x34] sm:$0xf]
    %v579 = vld [vmem:[%s8 + $0x38] sm:$0xf]
    %v580 = vld [vmem:[%s8 + $0x3c] sm:$0xf]
    %v581 = vld [vmem:[%s8 + $0x40] sm:$0xf]
    %v582 = vld [vmem:[%s8 + $0x44] sm:$0xf]
    %v583 = vld [vmem:[%s8 + $0x48] sm:$0xf]
    %v584 = vld [vmem:[%s8 + $0x4c] sm:$0xf]
    %v585 = vld [vmem:[%s3] sm:$0x1]
    %v586 = vld [vmem:[%s9] sm:$0xf]
    %v587 = vld [vmem:[%s9 + $0x4] sm:$0xf]
    %v590 = vunpack.c.l.b16 %v586
    %v591 = vunpack.c.l.b16 %v587
    %v592 = vpack.c.b16 %v591, %v590
    %v595 = vsel %vm488, %v585, 0
    %597 = vmatprep.subr.bf16.mxu0 0
    %598 = vmatpush1.bf16.msra.mxu0 0
    %599 = vmatprep.subr.bf16.mxu0 0
    %600 = vmatpush1.bf16.msra.mxu0 0
    %601 = vmatprep.subr.bf16.mxu0 0
    %602 = vmatpush1.bf16.msra.mxu0 0
    %603 = vmatprep.subr.bf16.mxu0 0
    %604 = vmatpush1.bf16.msra.mxu0 0
    %605 = vmatprep.subr.bf16.mxu0 0
    %606 = vmatpush1.bf16.msra.mxu0 0
    %607 = vmatprep.subr.bf16.mxu0 0
    %608 = vmatpush1.bf16.msra.mxu0 0
    %609 = vmatprep.subr.bf16.mxu0 0
    %610 = vmatpush1.bf16.msra.mxu0 0
    %611 = vmatprep.subr.bf16.mxu0 0
    %612 = vmatpush1.bf16.msra.mxu0 %v592
    %613 = vmatprep.subr.bf16.mxu0 0
    %614 = vmatpush2.bf16.msra.mxu0 0
    %615 = vmatprep.subr.bf16.mxu0 0
    %616 = vmatpush2.bf16.msra.mxu0 0
    %617 = vmatprep.subr.bf16.mxu0 0
    %618 = vmatpush2.bf16.msra.mxu0 0
    %619 = vmatprep.subr.bf16.mxu0 0
    %620 = vmatpush2.bf16.msra.mxu0 0
    %621 = vmatprep.subr.bf16.mxu0 0
    %622 = vmatpush2.bf16.msra.mxu0 0
    %623 = vmatprep.subr.bf16.mxu0 0
    %624 = vmatpush2.bf16.msra.mxu0 0
    %625 = vmatprep.subr.bf16.mxu0 0
    %626 = vmatpush2.bf16.msra.mxu0 0
    %627 = vmatprep.subr.bf16.mxu0 0
    %628 = vmatpush2.bf16.msra.mxu0 0
    %629 = vmatprep.mubr.bf16.mxu0 0
    %630 = vmatmul.mubr.bf16.gmra.mxu0 %v595
    %v631 = vpop.f32.mrf.mxu0
    %v632 = vadd.f32 0.0, %v631
    %v633 = vpop.f32.mrf.mxu0
    %v634 = vpop.f32.mrf.mxu0
    %v635 = vpop.f32.mrf.mxu0
    %636 = vdwg.mxu0
    %v657 = vunpack.c.l.b16 %v565
    %v658 = vunpack.c.l.b16 %v566
    %v659 = vunpack.c.l.b16 %v567
    %v660 = vunpack.c.l.b16 %v568
    %v661 = vunpack.c.l.b16 %v569
    %v662 = vunpack.c.l.b16 %v570
    %v663 = vunpack.c.l.b16 %v571
    %v664 = vunpack.c.l.b16 %v572
    %v665 = vunpack.c.l.b16 %v573
    %v666 = vunpack.c.l.b16 %v574
    %v667 = vunpack.c.l.b16 %v575
    %v668 = vunpack.c.l.b16 %v576
    %v669 = vunpack.c.l.b16 %v577
    %v670 = vunpack.c.l.b16 %v578
    %v671 = vunpack.c.l.b16 %v579
    %v672 = vunpack.c.l.b16 %v580
    %v673 = vunpack.c.l.b16 %v581
    %v674 = vunpack.c.l.b16 %v582
    %v675 = vunpack.c.l.b16 %v583
    %v676 = vunpack.c.l.b16 %v584
    %v677 = vpack.c.b16 %v658, %v657
    %v678 = vpack.c.b16 %v660, %v659
    %v679 = vpack.c.b16 %v662, %v661
    %v680 = vpack.c.b16 %v664, %v663
    %v681 = vpack.c.b16 %v666, %v665
    %v682 = vpack.c.b16 %v668, %v667
    %v683 = vpack.c.b16 %v670, %v669
    %v684 = vpack.c.b16 %v672, %v671
    %v685 = vpack.c.b16 %v674, %v673
    %v686 = vpack.c.b16 %v676, %v675
    %v698 = vsel %vm318, %v564, 0
    %700 = vmatprep.subr.bf16.mxu0 0
    %701 = vmatpush1.bf16.msra.mxu0 %v684
    %702 = vmatprep.subr.bf16.mxu0 0
    %703 = vmatpush1.bf16.msra.mxu0 %v683
    %704 = vmatprep.subr.bf16.mxu0 0
    %705 = vmatpush1.bf16.msra.mxu0 %v682
    %706 = vmatprep.subr.bf16.mxu0 0
    %707 = vmatpush1.bf16.msra.mxu0 %v681
    %708 = vmatprep.subr.bf16.mxu0 0
    %709 = vmatpush1.bf16.msra.mxu0 %v680
    %710 = vmatprep.subr.bf16.mxu0 0
    %711 = vmatpush1.bf16.msra.mxu0 %v679
    %712 = vmatprep.subr.bf16.mxu0 0
    %713 = vmatpush1.bf16.msra.mxu0 %v678
    %714 = vmatprep.subr.bf16.mxu0 0
    %715 = vmatpush1.bf16.msra.mxu0 %v677
    %716 = vmatprep.subr.bf16.mxu0 0
    %717 = vmatpush2.bf16.msra.mxu0 0
    %718 = vmatprep.subr.bf16.mxu0 0
    %719 = vmatpush2.bf16.msra.mxu0 0
    %720 = vmatprep.subr.bf16.mxu0 0
    %721 = vmatpush2.bf16.msra.mxu0 0
    %722 = vmatprep.subr.bf16.mxu0 0
    %723 = vmatpush2.bf16.msra.mxu0 0
    %724 = vmatprep.subr.bf16.mxu0 0
    %725 = vmatpush2.bf16.msra.mxu0 0
    %726 = vmatprep.subr.bf16.mxu0 0
    %727 = vmatpush2.bf16.msra.mxu0 0
    %728 = vmatprep.subr.bf16.mxu0 0
    %729 = vmatpush2.bf16.msra.mxu0 %v686
    %730 = vmatprep.subr.bf16.mxu0 0
    %731 = vmatpush2.bf16.msra.mxu0 %v685
    %732 = vmatprep.mubr.bf16.mxu0 %v698
    %733 = vmatmul.mubr.bf16.gmra.mxu0 %v563
    %v734 = vpop.f32.mrf.mxu0
    %v735 = vadd.f32 %v632, %v734
    %v736 = vpop.f32.mrf.mxu0
    %v737 = vpop.f32.mrf.mxu0
    %v738 = vpop.f32.mrf.mxu0
    %739 = vdwg.mxu0
    %v740 = vld [vmem:[%s10] sm:$0x1]
    %v742 = vlaneseq
    %v743 = vshrl.u32 %v742, 7
    %v744 = vsub.s32 0, %v743
    %v745 = vrot.slane %v740, %v744
    %v747 = vadd.f32 %v735, %v745
    %vm748 = vcmp.ge.f32.partialorder %v747, 0.0
    %v749 = vmul.f32 %v747, 0.01
    %v750 = vsel %vm748, %v747, %v749
    %v751 = vpack.c.bf16 %v750, %v750
    %v752 = vld [vmem:[%s11] sm:$0xf]
    %v753 = vld [vmem:[%s11 + $0x4] sm:$0xf]
    %v754 = vld [vmem:[%s11 + $0x8] sm:$0xf]
    %v755 = vld [vmem:[%s11 + $0xc] sm:$0xf]
    %v756 = vld [vmem:[%s12] sm:$0x1]
    %v758 = vlaneseq
    %v759 = vshrl.u32 %v758, 7
    %v760 = vsub.s32 0, %v759
    %v761 = vrot.slane %v756, %v760
    %v767 = vunpack.c.l.b16 %v752
    %v768 = vunpack.c.l.b16 %v753
    %v769 = vunpack.c.l.b16 %v754
    %v770 = vunpack.c.l.b16 %v755
    %v771 = vpack.c.b16 %v768, %v767
    %v772 = vpack.c.b16 %v770, %v769
    %v776 = vsel %vm318, %v751, 0
    %778 = vmatprep.subr.bf16.mxu0 0
    %779 = vmatpush1.bf16.msra.mxu0 0
    %780 = vmatprep.subr.bf16.mxu0 0
    %781 = vmatpush1.bf16.msra.mxu0 0
    %782 = vmatprep.subr.bf16.mxu0 0
    %783 = vmatpush1.bf16.msra.mxu0 0
    %784 = vmatprep.subr.bf16.mxu0 0
    %785 = vmatpush1.bf16.msra.mxu0 0
    %786 = vmatprep.subr.bf16.mxu0 0
    %787 = vmatpush1.bf16.msra.mxu0 0
    %788 = vmatprep.subr.bf16.mxu0 0
    %789 = vmatpush1.bf16.msra.mxu0 0
    %790 = vmatprep.subr.bf16.mxu0 0
    %791 = vmatpush1.bf16.msra.mxu0 %v772
    %792 = vmatprep.subr.bf16.mxu0 0
    %793 = vmatpush1.bf16.msra.mxu0 %v771
    %794 = vmatprep.subr.bf16.mxu0 0
    %795 = vmatpush2.bf16.msra.mxu0 0
    %796 = vmatprep.subr.bf16.mxu0 0
    %797 = vmatpush2.bf16.msra.mxu0 0
    %798 = vmatprep.subr.bf16.mxu0 0
    %799 = vmatpush2.bf16.msra.mxu0 0
    %800 = vmatprep.subr.bf16.mxu0 0
    %801 = vmatpush2.bf16.msra.mxu0 0
    %802 = vmatprep.subr.bf16.mxu0 0
    %803 = vmatpush2.bf16.msra.mxu0 0
    %804 = vmatprep.subr.bf16.mxu0 0
    %805 = vmatpush2.bf16.msra.mxu0 0
    %806 = vmatprep.subr.bf16.mxu0 0
    %807 = vmatpush2.bf16.msra.mxu0 0
    %808 = vmatprep.subr.bf16.mxu0 0
    %809 = vmatpush2.bf16.msra.mxu0 0
    %810 = vmatprep.mubr.bf16.mxu0 0
    %811 = vmatmul.mubr.bf16.gmra.mxu0 %v776
    %v812 = vpop.f32.mrf.mxu0
    %v813 = vadd.f32 %v761, %v812
    %v814 = vpop.f32.mrf.mxu0
    %v815 = vpop.f32.mrf.mxu0
    %v816 = vpop.f32.mrf.mxu0
    %817 = vdwg.mxu0
    %818 = vst [vmem:[#allocation2] sm:$0x3] %v813
    // Predicated region
    $region54: #{workload_forward.1} parent=1 // pred_check
      _
    $region55: #{workload_forward.1} parent=1 // pred_check_branch
      %820 = sbr.rel (0) target = $region57
    $region56: #{workload_forward.1} parent=1 // pred_region
      %s822 = ssub.s32 32, 32
      %823 = vsyncadd [#allocation3], %s822
      %s825 = sshll.u32 [#allocation2], 4
      %s826 = int_to_ptr.vmem [resolvable:$true] %s825
      %828 = dma.vmem_to_hbm [thread:$0]  %s826, 32, %s13, [#allocation3]
    $region57: #{workload_forward.1} parent=1 // pred_fallthru
      _
    // Predicated region
    $region58: #{workload_forward.1} parent=1 // pred_check
      _
    $region59: #{workload_forward.1} parent=1 // pred_check_branch
      %830 = sbr.rel (0) target = $region61
    $region60: #{workload_forward.1} parent=1 // pred_region
      %831 = dma.done [#allocation3], 32
    $region61: #{workload_forward.1} parent=1 // pred_fallthru
      _
    %832 = vsyncpa [#allocation3], 1

</llo_original>
